<compile_context>
chip_gen: v7x
topology: tpu7x:2x2x1
jax: 0.10.0
libtpu: 0.0.40
codegen_flags: <defaults>
</compile_context>

<pallas_src>
import jax
import jax.numpy as jnp
from jax.experimental import pallas as pl
from jax.experimental.pallas import tpu as pltpu


def _round_up(x: int, m: int) -> int:
    return ((x + m - 1) // m) * m


def _vmem_capacity_bytes() -> int:
    try:
        return int(pltpu.get_tpu_info().vmem_capacity_bytes)
    except Exception:
        return 64 << 20  # conservative (v7x per-TC) if the query is unavailable


def _vmem_budget(vmem_cap: int) -> int:
    # v7x: 64 MiB per TC -> keep the double-buffered working set <= ~40 MiB.
    # v5e / v6e: 128 MiB -> allow up to ~96 MiB.
    return (40 << 20) if vmem_cap <= (64 << 20) else (96 << 20)


def _tile_footprint(tm: int, tn: int, tk: int, elt: int) -> int:
    # double-buffered x / W / bias input tiles + double-buffered output tile
    # + f32 accumulator scratch
    return (2 * (tm * tk + tk * tn + tn) * elt
            + 2 * tm * tn * elt
            + tm * tn * 4)


def _select_tiles(B, out_size, in_size, elt, vmem_cap, sublane=8):
    budget = _vmem_budget(vmem_cap)
    Kp128 = _round_up(in_size, 128)
    Np128 = _round_up(out_size, 128)

    # M tile: small batch -> a single M block so the weight streams through
    # exactly once; large batch -> 256 (f32) / 512 (bf16) rows per tile.
    if B <= 256:
        tm = _round_up(B, sublane)
    else:
        tm = 256 if elt >= 4 else 512

    # N tile, lane-dense. If M collapses to one block, keep >=2 N blocks so
    # the v7x megacore has parallel work for both TensorCores.
    tn = min(512, Np128)
    m_blocks = _round_up(B, tm) // tm
    if m_blocks == 1 and Np128 >= 256:
        tn = min(tn, max(128, _round_up(Np128 // 2, 128)))

    # K tile: biggest that fits the generation-aware VMEM budget.
    tk = 128
    for cand in (2048, 1024, 512, 256, 128):
        cand = min(cand, Kp128)
        if _tile_footprint(tm, tn, cand, elt) <= budget:
            tk = cand
            break
    return tm, tn, tk


def _linear_kernel(x_ref, w_ref, b_ref, o_ref, acc_ref):
    """One (tm, tn) output tile, accumulated over the K grid axis.

    x_ref:   (tm, tk)  activations tile
    w_ref:   (tk, tn)  weight tile, pre-transposed to (K, N) -> MXU-native dot
    b_ref:   (1, tn)   bias tile
    o_ref:   (tm, tn)  output tile
    acc_ref: (tm, tn)  f32 VMEM accumulator (persists across the K axis)
    """
    k = pl.program_id(2)

    @pl.when(k == 0)
    def _():
        # Seed the accumulator with the broadcast bias (saves the finalize add).
        acc_ref[...] = jnp.broadcast_to(
            b_ref[...].astype(jnp.float32), acc_ref.shape)

    acc_ref[...] += jnp.dot(x_ref[...], w_ref[...],
                            preferred_element_type=jnp.float32)

    @pl.when(k == pl.num_programs(2) - 1)
    def _():
        o_ref[...] = acc_ref[...].astype(o_ref.dtype)


# Below this much work, pallas_call dispatch + per-step overhead dwarfs the FLOPs.
_TINY_WORK_THRESHOLD = 1 << 18


class MyLinearPallas:
    """Pallas-backed equivalent of MyLinear.forward: y = x @ W^T + b.

    Caches the padded + transposed weight (and padded bias) per tiling so the
    per-call hot path only pads the activations.
    """

    def __init__(self, weight, bias, *, compute_dtype=None):
        weight = jnp.asarray(weight)
        bias = jnp.asarray(bias)
        assert weight.ndim == 2 and bias.ndim == 1
        assert bias.shape[0] == weight.shape[0]
        self.out_size, self.in_size = weight.shape
        self.weight = weight
        self.bias = bias
        # Optional bf16 MXU inputs (f32 accumulation stays). Default: f32.
        self.compute_dtype = compute_dtype
        self._wcache = {}

    # -- cached, per-tiling padded/transposed weight + padded bias -----------
    def _prepared(self, tn, tk, cdtype):
        key = (int(tn), int(tk), jnp.dtype(cdtype).name)
        ent = self._wcache.get(key)
        if ent is None:
            Np = _round_up(self.out_size, tn)
            Kp = _round_up(self.in_size, tk)
            wp = jnp.pad(self.weight, ((0, Np - self.out_size),
                                       (0, Kp - self.in_size)))
            wt = jnp.asarray(wp.T, cdtype)                      # (Kp, Np)
            bp = jnp.pad(self.bias, (0, Np - self.out_size)).reshape(1, Np)
            wt, bp = jax.block_until_ready((wt, bp))            # materialize once
            ent = (wt, bp, Np, Kp)
            self._wcache[key] = ent
        return ent

    # -- tiled Pallas forward -------------------------------------------------
    def _pallas_forward(self, x):
        B, in_size = x.shape
        out_dtype = x.dtype
        cdtype = jnp.dtype(self.compute_dtype or x.dtype)
        elt = cdtype.itemsize
        sublane = 16 if elt < 4 else 8

        vmem_cap = _vmem_capacity_bytes()
        tm, tn, tk = _select_tiles(B, self.out_size, in_size, elt, vmem_cap,
                                   sublane=sublane)
        wt, bp, Np, Kp = self._prepared(tn, tk, cdtype)

        Bp = _round_up(B, tm)
        # K zero-padding contributes 0 to the accumulation; M/N padding is
        # sliced off below (keep this invariant if the grid ever changes).
        xp = jnp.pad(x, ((0, Bp - B), (0, Kp - in_size))).astype(cdtype)

        grid = (Bp // tm, Np // tn, Kp // tk)

        footprint = _tile_footprint(tm, tn, tk, elt)
        vmem_limit = int(min(max(int(footprint * 1.25), 4 << 20),
                             _vmem_budget(vmem_cap)))

        cost = pl.CostEstimate(
            flops=2 * Bp * Kp * Np,
            transcendentals=0,
            bytes_accessed=(Bp * Kp + Kp * Np + Np) * elt
            + Bp * Np * jnp.dtype(out_dtype).itemsize,
        )

        out_padded = pl.pallas_call(
            _linear_kernel,
            out_shape=jax.ShapeDtypeStruct((Bp, Np), out_dtype),
            grid_spec=pltpu.PrefetchScalarGridSpec(
                num_scalar_prefetch=0,
                grid=grid,
                in_specs=[
                    pl.BlockSpec((tm, tk), lambda i, j, k: (i, k)),   # x
                    pl.BlockSpec((tk, tn), lambda i, j, k: (k, j)),   # W^T (K, N)
                    pl.BlockSpec((1, tn), lambda i, j, k: (0, j)),    # bias
                ],
                out_specs=pl.BlockSpec((tm, tn), lambda i, j, k: (i, j)),
                scratch_shapes=[pltpu.VMEM((tm, tn), jnp.float32)],
            ),
            compiler_params=pltpu.CompilerParams(
                dimension_semantics=("parallel", "parallel", "arbitrary"),
                vmem_limit_bytes=vmem_limit,
            ),
            cost_estimate=cost,
        )(xp, wt, bp)

        return out_padded[:B, :self.out_size]

    def __call__(self, inputs, *, force_pallas=False):
        squeeze = inputs.ndim == 1
        x = inputs[None, :] if squeeze else inputs
        B = x.shape[0]

        if (not force_pallas
                and B * self.in_size * self.out_size < _TINY_WORK_THRESHOLD):
            # Tiny-shape guard: XLA's fused dot beats any custom kernel here.
            out = jnp.dot(x, self.weight.T) + self.bias
        else:
            out = self._pallas_forward(x)

        return out[0] if squeeze else out


def my_linear_forward(inputs, weight, bias, *, force_pallas=False):
    """One-off functional wrapper (no weight caching across calls)."""
    return MyLinearPallas(weight, bias)(inputs, force_pallas=force_pallas)


if __name__ == "__main__":
    key = jax.random.PRNGKey(0)

    # --- Case 1: the documented 1-D module shape (32 -> 16). Tiny-shape path,
    #     plus a forced Pallas run to verify kernel numerics at B=1.
    k_x, k_w, k_b = jax.random.split(key, 3)
    in1, out1 = 32, 16
    w1 = jax.random.normal(k_w, (out1, in1), dtype=jnp.float32)
    b1 = jax.random.normal(k_b, (out1,), dtype=jnp.float32)
    x1 = jax.random.normal(k_x, (in1,), dtype=jnp.float32)

    layer1 = MyLinearPallas(w1, b1)
    y1 = layer1(x1)                          # jnp fallback path
    y1_pl = layer1(x1, force_pallas=True)    # Pallas path (padded + sliced)
    jax.block_until_ready((y1, y1_pl))
    y1_ref = jnp.matmul(x1, w1.T) + b1
    assert y1.shape == (out1,)
    assert jnp.allclose(y1, y1_ref, atol=1e-5, rtol=1e-5)
    assert jnp.allclose(y1_pl, y1_ref, atol=1e-5, rtol=1e-5)

    # --- Case 2: batched, non-tile-aligned shapes exercising M/N/K padding,
    #     the small-batch single-M-block tiling, and the cached (K, N) weight.
    k_x2, k_w2, k_b2 = jax.random.split(jax.random.PRNGKey(1), 3)
    B2, in2, out2 = 10, 300, 384
    w2 = jax.random.normal(k_w2, (out2, in2), dtype=jnp.float32)
    b2 = jax.random.normal(k_b2, (out2,), dtype=jnp.float32)
    x2 = jax.random.normal(k_x2, (B2, in2), dtype=jnp.float32)

    layer2 = MyLinearPallas(w2, b2)
    y2 = layer2(x2)
    y2_again = layer2(x2)   # second call reuses the cached padded/transposed W
    jax.block_until_ready((y2, y2_again))
    y2_ref = jnp.matmul(x2, w2.T) + b2
    assert y2.shape == (B2, out2)
    assert jnp.allclose(y2, y2_ref, atol=1e-4, rtol=1e-4)
    assert jnp.allclose(y2_again, y2_ref, atol=1e-4, rtol=1e-4)

    # --- Case 3: larger tile-aligned shapes (multi-block N "parallel" axis).
    k_x3, k_w3, k_b3 = jax.random.split(jax.random.PRNGKey(2), 3)
    B3, in3, out3 = 256, 512, 512
    w3 = jax.random.normal(k_w3, (out3, in3), dtype=jnp.float32)
    b3 = jax.random.normal(k_b3, (out3,), dtype=jnp.float32)
    x3 = jax.random.normal(k_x3, (B3, in3), dtype=jnp.float32)

    layer3 = MyLinearPallas(w3, b3)
    y3 = layer3(x3)
    jax.block_until_ready(y3)
    y3_ref = jnp.matmul(x3, w3.T) + b3
    assert y3.shape == (B3, out3)
    assert jnp.allclose(y3, y3_ref, atol=1e-3, rtol=1e-3)

    print("KERNEL_OK")
</pallas_src>

<mosaic_0001>
module attributes {stable_mosaic.version = 11 : i64} {
  func.func @_linear_kernel(%arg0: i32, %arg1: i32, %arg2: i32, %arg3: memref<8x128xf32, #tpu.memory_space<vmem>>, %arg4: memref<128x128xf32, #tpu.memory_space<vmem>>, %arg5: memref<1x128xf32, #tpu.memory_space<vmem>>, %arg6: memref<8x128xf32, #tpu.memory_space<vmem>>, %arg7: memref<8x128xf32, #tpu.memory_space<vmem>>) attributes {dimension_semantics = [#tpu.dimension_semantics<parallel>, #tpu.dimension_semantics<parallel>, #tpu.dimension_semantics<arbitrary>], iteration_bounds = array<i64: 1, 1, 1>, scalar_prefetch = 0 : i64, scratch_operands = 1 : i64, tpu.core_type = #tpu.core_type<tc>, window_params = [{transform_indices = @transform_0, window_bounds = array<i64: 8, 128>}, {transform_indices = @transform_1, window_bounds = array<i64: 128, 128>}, {transform_indices = @transform_2, window_bounds = array<i64: 1, 128>}, {transform_indices = @transform_3, window_bounds = array<i64: 8, 128>}]} {
    %c0_i32 = arith.constant 0 : i32
    %0 = arith.cmpi eq, %arg2, %c0_i32 : i32
    %1 = arith.extui %0 : i1 to i32
    %c0_i32_0 = arith.constant 0 : i32
    %2 = arith.cmpi ne, %1, %c0_i32_0 : i32
    scf.if %2 {
      %c0_10 = arith.constant 0 : index
      %c0_11 = arith.constant 0 : index
      %12 = vector.load %arg5[%c0_10, %c0_11] : memref<1x128xf32, #tpu.memory_space<vmem>>, vector<1x128xf32>
      %13 = vector.shape_cast %12 : vector<1x128xf32> to vector<1x128xf32>
      %14 = vector.broadcast %13 : vector<1x128xf32> to vector<8x128xf32>
      %c0_12 = arith.constant 0 : index
      %c0_13 = arith.constant 0 : index
      %15 = vector.load %arg7[%c0_12, %c0_13] : memref<8x128xf32, #tpu.memory_space<vmem>>, vector<8x128xf32>
      tpu.vector_store %arg7[%c0_12, %c0_13], %14 {strides = array<i32>} : memref<8x128xf32, #tpu.memory_space<vmem>>, vector<8x128xf32>,
    } else {
    }
    %c0 = arith.constant 0 : index
    %c0_1 = arith.constant 0 : index
    %3 = vector.load %arg7[%c0, %c0_1] : memref<8x128xf32, #tpu.memory_space<vmem>>, vector<8x128xf32>
    %c0_2 = arith.constant 0 : index
    %c0_3 = arith.constant 0 : index
    %4 = vector.load %arg3[%c0_2, %c0_3] : memref<8x128xf32, #tpu.memory_space<vmem>>, vector<8x128xf32>
    %c0_4 = arith.constant 0 : index
    %c0_5 = arith.constant 0 : index
    %5 = vector.load %arg4[%c0_4, %c0_5] : memref<128x128xf32, #tpu.memory_space<vmem>>, vector<128x128xf32>
    %cst = arith.constant dense<0.000000e+00> : vector<8x128xf32>
    %6 = tpu.matmul %4, %5, %cst {dimension_numbers = #tpu.dot_dimension_numbers<[1], [0], [0], [1], [0, 0, 1, 1], [], []>} : vector<8x128xf32>, vector<128x128xf32>, vector<8x128xf32> -> vector<8x128xf32>
    %7 = arith.addf %3, %6 : vector<8x128xf32>
    %c0_6 = arith.constant 0 : index
    %c0_7 = arith.constant 0 : index
    %8 = vector.load %arg7[%c0_6, %c0_7] : memref<8x128xf32, #tpu.memory_space<vmem>>, vector<8x128xf32>
    tpu.vector_store %arg7[%c0_6, %c0_7], %7 {strides = array<i32>} : memref<8x128xf32, #tpu.memory_space<vmem>>, vector<8x128xf32>,
    %c0_i32_8 = arith.constant 0 : i32
    %9 = arith.cmpi eq, %arg2, %c0_i32_8 : i32
    %10 = arith.extui %9 : i1 to i32
    %c0_i32_9 = arith.constant 0 : i32
    %11 = arith.cmpi ne, %10, %c0_i32_9 : i32
    scf.if %11 {
      %c0_10 = arith.constant 0 : index
      %c0_11 = arith.constant 0 : index
      %12 = vector.load %arg7[%c0_10, %c0_11] : memref<8x128xf32, #tpu.memory_space<vmem>>, vector<8x128xf32>
      %c0_12 = arith.constant 0 : index
      %c0_13 = arith.constant 0 : index
      %13 = vector.load %arg6[%c0_12, %c0_13] : memref<8x128xf32, #tpu.memory_space<vmem>>, vector<8x128xf32>
      tpu.vector_store %arg6[%c0_12, %c0_13], %12 {strides = array<i32>} : memref<8x128xf32, #tpu.memory_space<vmem>>, vector<8x128xf32>,
    } else {
    }
    return
  }
  func.func @transform_0(%arg0: i32, %arg1: i32, %arg2: i32) -> (i32, i32) {
    %c0_i32 = arith.constant 0 : i32
    return %arg0, %arg2 : i32, i32
  }
  func.func @transform_1(%arg0: i32, %arg1: i32, %arg2: i32) -> (i32, i32) {
    %c0_i32 = arith.constant 0 : i32
    return %arg2, %arg1 : i32, i32
  }
  func.func @transform_2(%arg0: i32, %arg1: i32, %arg2: i32) -> (i32, i32) {
    %c0_i32 = arith.constant 0 : i32
    %c0_i32_0 = arith.constant 0 : i32
    return %c0_i32, %arg1 : i32, i32
  }
  func.func @transform_3(%arg0: i32, %arg1: i32, %arg2: i32) -> (i32, i32) {
    %c0_i32 = arith.constant 0 : i32
    return %arg0, %arg1 : i32, i32
  }
}

</mosaic_0001>

<llo_original>
// kernel: tpu_custom_call.1
$region0: #{tpu_custom_call.1}
  #allocation0 [shape = 'u32[]', space=smem, size = 0x4, offset = 0x4, fixed_abs, tag = 'smem constant byte address 0x4 - core index']
  #allocation1 [shape = 'u32[144,128]{1,0:T(1,128)}', space=vmem, size = 0x12000, scoped, tag = 'internal scratch']
  #allocation2 [shape = 'f32[8,128]{1,0:T(8,128)}', space=vmem, size = 0x1000, scoped, tag = 'scratch operand']
  %s0 = inlined_call_operand.hbm [shape: f32[8,128], index: 0, kind: input, shape index: {}]
  %s1 = inlined_call_operand.hbm [shape: f32[128,128], index: 1, kind: input, shape index: {}]
  %s2 = inlined_call_operand.vmem [shape: f32[1,128], index: 2, kind: input, shape index: {}]
  %s3 = inlined_call_operand.hbm [shape: f32[8,128], index: 3, kind: output, shape index: {}]
  %s4 = sld [smem:[#allocation0]]
  $region38: #{tpu_custom_call.1} parent=0
    _
  %s6 = ssub.s32 1, %s4
  %s7 = scalar_select 0, %s6, %s4
  $region1: #{tpu_custom_call.1} parent=0
    #allocation3 [shape = 'u8[4096]{0}', space=vmem, size = 0x1000, scoped, tag = 'input window, operand 0, single buffered']
    #allocation4 [shape = 's32[1]{0}', space=sflag, size = 0x4, scoped, tag = 'scoped memory for tpu_custom_call.1']
    #allocation5 [shape = 's32[1]{0}', space=sflag, size = 0x4, scoped, tag = 'scoped memory for tpu_custom_call.1']
    #allocation6 [shape = 'u8[65536]{0}', space=vmem, size = 0x10000, scoped, tag = 'input window, operand 1, single buffered']
    #allocation7 [shape = 's32[1]{0}', space=sflag, size = 0x4, scoped, tag = 'scoped memory for tpu_custom_call.1']
    #allocation8 [shape = 'u8[4096]{0}', space=vmem, size = 0x1000, scoped, tag = 'output window, operand 0, single buffered']
    %8 = vsyncpa [#allocation4], 0
    %9 = vsyncpa [#allocation7], 0
    %10 = vsyncpa [#allocation5], 0
    // Predicated region
    $region2: #{tpu_custom_call.1} parent=1 // pred_check
      _
    $region3: #{tpu_custom_call.1} parent=1 // pred_check_branch
      %12 = sbr.rel (0) target = $region5
    $region4: #{tpu_custom_call.1} parent=1 // pred_region
      %s14 = ssub.s32 128, 128
      %15 = vsyncadd [#allocation4], %s14
      %s17 = sshll.u32 [#allocation3], 4
      %s18 = int_to_ptr.vmem [resolvable:$true] %s17
      %20 = dma.hbm_to_vmem [thread:$0]  %s0, 128, %s18, [#allocation4]
    $region5: #{tpu_custom_call.1} parent=1 // pred_fallthru
      _
    // Predicated region
    $region6: #{tpu_custom_call.1} parent=1 // pred_check
      _
    $region7: #{tpu_custom_call.1} parent=1 // pred_check_branch
      %22 = sbr.rel (0) target = $region9
    $region8: #{tpu_custom_call.1} parent=1 // pred_region
      %s24 = ssub.s32 2048, 2048
      %25 = vsyncadd [#allocation7], %s24
      %s26 = sshll.u32 [#allocation6], 4
      %s27 = int_to_ptr.vmem [resolvable:$true] %s26
      %32 = dma.hbm_to_vmem [thread:$0]  %s1, 2048, %s27, [#allocation7], 128, 128, 8
    $region9: #{tpu_custom_call.1} parent=1 // pred_fallthru
      _
    // Predicated region
    $region10: #{tpu_custom_call.1} parent=1 // pred_check
      _
    $region11: #{tpu_custom_call.1} parent=1 // pred_check_branch
      %34 = sbr.rel (0) target = $region13
    $region12: #{tpu_custom_call.1} parent=1 // pred_region
      _
    $region13: #{tpu_custom_call.1} parent=1 // pred_fallthru
      _
    // Predicated region
    $region14: #{tpu_custom_call.1} parent=1 // pred_check
      _
    $region15: #{tpu_custom_call.1} parent=1 // pred_check_branch
      %36 = sbr.rel (0) target = $region17
    $region16: #{tpu_custom_call.1} parent=1 // pred_region
      %37 = dma.done [#allocation4], 128
    $region17: #{tpu_custom_call.1} parent=1 // pred_fallthru
      _
    // Predicated region
    $region18: #{tpu_custom_call.1} parent=1 // pred_check
      _
    $region19: #{tpu_custom_call.1} parent=1 // pred_check_branch
      %39 = sbr.rel (0) target = $region21
    $region20: #{tpu_custom_call.1} parent=1 // pred_region
      %40 = dma.done [#allocation7], 2048
    $region21: #{tpu_custom_call.1} parent=1 // pred_fallthru
      _
    %p41 = scmp.eq.s32.totalorder 0, 0
    // Predicated region
    $region22: #{tpu_custom_call.1} parent=1 // pred_check
      %p42 = pneg %p41
    $region23: #{tpu_custom_call.1} parent=1 // pred_check_branch
      %44 = sbr.rel (%p42) target = $region25
    $region24: #{tpu_custom_call.1} parent=1 // pred_region
      %v45 = vld [vmem:[%s2] sm:$0x1]
      %v47 = vlaneseq
      %v48 = vshrl.u32 %v47, 7
      %v49 = vsub.s32 0, %v48
      %v50 = vrot.slane %v45, %v49
      %52 = vst [vmem:[#allocation2] sm:$0xff] %v50
    $region25: #{tpu_custom_call.1} parent=1 // pred_fallthru
      _
    %v53 = vld [vmem:[#allocation2] sm:$0xff]
    %v54 = vld [vmem:[#allocation3] sm:$0xff]
    %v55 = vld [vmem:[#allocation6] sm:$0xff]
    %v56 = vld [vmem:[#allocation6 + $0x8] sm:$0xff]
    %v57 = vld [vmem:[#allocation6 + $0x10] sm:$0xff]
    %v58 = vld [vmem:[#allocation6 + $0x18] sm:$0xff]
    %v59 = vld [vmem:[#allocation6 + $0x20] sm:$0xff]
    %v60 = vld [vmem:[#allocation6 + $0x28] sm:$0xff]
    %v61 = vld [vmem:[#allocation6 + $0x30] sm:$0xff]
    %v62 = vld [vmem:[#allocation6 + $0x38] sm:$0xff]
    %v63 = vld [vmem:[#allocation6 + $0x40] sm:$0xff]
    %v64 = vld [vmem:[#allocation6 + $0x48] sm:$0xff]
    %v65 = vld [vmem:[#allocation6 + $0x50] sm:$0xff]
    %v66 = vld [vmem:[#allocation6 + $0x58] sm:$0xff]
    %v67 = vld [vmem:[#allocation6 + $0x60] sm:$0xff]
    %v68 = vld [vmem:[#allocation6 + $0x68] sm:$0xff]
    %v69 = vld [vmem:[#allocation6 + $0x70] sm:$0xff]
    %v70 = vld [vmem:[#allocation6 + $0x78] sm:$0xff]
    %71 = vmatprep.subr.mxu0 0.0
    %72 = vmatpush1.msra.mxu0 %v55
    %73 = vmatprep.subr.mxu0 0.0
    %74 = vmatpush1.msra.mxu0 %v56
    %75 = vmatprep.subr.mxu0 0.0
    %76 = vmatpush1.msra.mxu0 %v57
    %77 = vmatprep.subr.mxu0 0.0
    %78 = vmatpush1.msra.mxu0 %v58
    %79 = vmatprep.subr.mxu0 0.0
    %80 = vmatpush1.msra.mxu0 %v59
    %81 = vmatprep.subr.mxu0 0.0
    %82 = vmatpush1.msra.mxu0 %v60
    %83 = vmatprep.subr.mxu0 0.0
    %84 = vmatpush1.msra.mxu0 %v61
    %85 = vmatprep.subr.mxu0 0.0
    %86 = vmatpush1.msra.mxu0 %v62
    %87 = vmatprep.subr.mxu0 0.0
    %88 = vmatpush1.msra.mxu0 %v63
    %89 = vmatprep.subr.mxu0 0.0
    %90 = vmatpush1.msra.mxu0 %v64
    %91 = vmatprep.subr.mxu0 0.0
    %92 = vmatpush1.msra.mxu0 %v65
    %93 = vmatprep.subr.mxu0 0.0
    %94 = vmatpush1.msra.mxu0 %v66
    %95 = vmatprep.subr.mxu0 0.0
    %96 = vmatpush1.msra.mxu0 %v67
    %97 = vmatprep.subr.mxu0 0.0
    %98 = vmatpush1.msra.mxu0 %v68
    %99 = vmatprep.subr.mxu0 0.0
    %100 = vmatpush1.msra.mxu0 %v69
    %101 = vmatprep.subr.mxu0 0.0
    %102 = vmatpush1.msra.mxu0 %v70
    %103 = vmatprep.subr.mxu0 0.0
    %104 = vmatpush1.msra.mxu0 0.0
    %105 = vmatprep.subr.mxu0 0.0
    %106 = vmatpush1.msra.mxu0 0.0
    %107 = vmatprep.subr.mxu0 0.0
    %108 = vmatpush1.msra.mxu0 0.0
    %109 = vmatprep.subr.mxu0 0.0
    %110 = vmatpush1.msra.mxu0 0.0
    %111 = vmatprep.subr.mxu0 0.0
    %112 = vmatpush1.msra.mxu0 0.0
    %113 = vmatprep.subr.mxu0 0.0
    %114 = vmatpush1.msra.mxu0 0.0
    %115 = vmatprep.subr.mxu0 0.0
    %116 = vmatpush1.msra.mxu0 0.0
    %117 = vmatprep.subr.mxu0 0.0
    %118 = vmatpush1.msra.mxu0 0.0
    %119 = vmatprep.subr.mxu0 0.0
    %120 = vmatpush1.msra.mxu0 0.0
    %121 = vmatprep.subr.mxu0 0.0
    %122 = vmatpush1.msra.mxu0 0.0
    %123 = vmatprep.subr.mxu0 0.0
    %124 = vmatpush1.msra.mxu0 0.0
    %125 = vmatprep.subr.mxu0 0.0
    %126 = vmatpush1.msra.mxu0 0.0
    %127 = vmatprep.subr.mxu0 0.0
    %128 = vmatpush1.msra.mxu0 0.0
    %129 = vmatprep.subr.mxu0 0.0
    %130 = vmatpush1.msra.mxu0 0.0
    %131 = vmatprep.subr.mxu0 0.0
    %132 = vmatpush1.msra.mxu0 0.0
    %133 = vmatprep.subr.mxu0 0.0
    %134 = vmatpush1.msra.mxu0 0.0
    %135 = vmatprep.mubr.f32.mxu0 0.0
    %136 = vmatmul.mubr.f32.gmra.mrb[0].mxu0 %v54
    %v137 = vpop.f32.mrb[0].mxu0
    %v138 = vadd.f32 0.0, %v137
    %v139 = vpop.f32.mrb[0].mxu0
    %140 = vdwg.mxu0
    %v141 = vadd.f32 %v53, %v138
    %142 = vst [vmem:[#allocation2] sm:$0xff] %v141
    // Predicated region
    $region26: #{tpu_custom_call.1} parent=1 // pred_check
      %p143 = pneg %p41
    $region27: #{tpu_custom_call.1} parent=1 // pred_check_branch
      %145 = sbr.rel (%p143) target = $region29
    $region28: #{tpu_custom_call.1} parent=1 // pred_region
      %v146 = vld [vmem:[#allocation2] sm:$0xff]
      %147 = vst [vmem:[#allocation8] sm:$0xff] %v146
    $region29: #{tpu_custom_call.1} parent=1 // pred_fallthru
      _
    // Predicated region
    $region30: #{tpu_custom_call.1} parent=1 // pred_check
      _
    $region31: #{tpu_custom_call.1} parent=1 // pred_check_branch
      %149 = sbr.rel (0) target = $region33
    $region32: #{tpu_custom_call.1} parent=1 // pred_region
      %s151 = ssub.s32 128, 128
      %152 = vsyncadd [#allocation5], %s151
      %s154 = sshll.u32 [#allocation8], 4
      %s155 = int_to_ptr.vmem [resolvable:$true] %s154
      %157 = dma.vmem_to_hbm [thread:$0]  %s155, 128, %s3, [#allocation5]
    $region33: #{tpu_custom_call.1} parent=1 // pred_fallthru
      _
    // Predicated region
    $region34: #{tpu_custom_call.1} parent=1 // pred_check
      _
    $region35: #{tpu_custom_call.1} parent=1 // pred_check_branch
      %159 = sbr.rel (0) target = $region37
    $region36: #{tpu_custom_call.1} parent=1 // pred_region
      %160 = dma.done [#allocation5], 128
    $region37: #{tpu_custom_call.1} parent=1 // pred_fallthru
      _
    %161 = vsyncpa [#allocation4], 1
    %162 = vsyncpa [#allocation7], 1
    %163 = vsyncpa [#allocation5], 1

</llo_original>
